<compile_context>
chip_gen: v6e
topology: v6e:2x2x1
jax: 0.10.0
libtpu: 0.0.40
codegen_flags: <defaults>
</compile_context>

<pallas_src>
import functools

import jax
import jax.numpy as jnp
from jax import lax
from jax.experimental import pallas as pl
from jax.experimental.pallas import tpu as pltpu


def vrnn_proposal_kernel(phi_ref, h_ref, a_ref,
                         w_phi_ref, w_h_ref, w_a_ref, b1_ref,
                         w_head_ref, b_head_ref,
                         out_ref, *, z_dim):
    # enc = ReLU(Linear([phi_x, h, a]))  — split-weight form of the concat.
    t = (jnp.dot(phi_ref[...], w_phi_ref[...], preferred_element_type=jnp.float32)
         + jnp.dot(h_ref[...], w_h_ref[...], preferred_element_type=jnp.float32)
         + jnp.dot(a_ref[...], w_a_ref[...], preferred_element_type=jnp.float32)
         + b1_ref[...])
    t = jnp.maximum(t, 0.0)

    # Fused heads: [mean | std_pre] in one matmul -> one lane-dense output slab.
    y = jnp.dot(t, w_head_ref[...], preferred_element_type=jnp.float32) + b_head_ref[...]

    # Numerically-stable softplus applied only to the second half (lane mask).
    sp = jnp.maximum(y, 0.0) + jnp.log1p(jnp.exp(-jnp.abs(y)))
    lane = lax.broadcasted_iota(jnp.int32, y.shape, 1)
    out = jnp.where(lane < z_dim, y, sp)

    out_ref[...] = out.astype(out_ref.dtype)


def vrnn_proposal(phi_x, h, encoded_action, params, *, tile_n=512):
    """Returns (enc_mean, enc_std), each of shape [B, P, z_dim]."""
    B, P, phi_dim = phi_x.shape
    h_dim = h.shape[-1]
    a_dim = encoded_action.shape[-1]
    z_dim = params["b_head"].shape[-1] // 2
    N = B * P

    phi_flat = phi_x.reshape(N, phi_dim)
    h_flat = h.reshape(N, h_dim)
    a_flat = encoded_action.reshape(N, a_dim)

    # Large tiles for bandwidth; clamp so tiny inputs don't pad pointlessly.
    tile = max(8, min(int(tile_n), pl.cdiv(N, 8) * 8))
    tile = (tile // 8) * 8
    n_pad = pl.cdiv(N, tile) * tile
    if n_pad != N:
        pad = n_pad - N
        phi_flat = jnp.pad(phi_flat, ((0, pad), (0, 0)))
        h_flat = jnp.pad(h_flat, ((0, pad), (0, 0)))
        a_flat = jnp.pad(a_flat, ((0, pad), (0, 0)))

    grid = (n_pad // tile,)

    kernel = functools.partial(vrnn_proposal_kernel, z_dim=z_dim)

    fused = pl.pallas_call(
        kernel,
        out_shape=jax.ShapeDtypeStruct((n_pad, 2 * z_dim), phi_x.dtype),
        grid=grid,
        in_specs=[
            pl.BlockSpec((tile, phi_dim), lambda i: (i, 0)),       # phi_x rows
            pl.BlockSpec((tile, h_dim), lambda i: (i, 0)),         # h rows
            pl.BlockSpec((tile, a_dim), lambda i: (i, 0)),         # action rows
            pl.BlockSpec((phi_dim, h_dim), lambda i: (0, 0)),      # W1_phi
            pl.BlockSpec((h_dim, h_dim), lambda i: (0, 0)),        # W1_h
            pl.BlockSpec((a_dim, h_dim), lambda i: (0, 0)),        # W1_a
            pl.BlockSpec((1, h_dim), lambda i: (0, 0)),            # b1
            pl.BlockSpec((h_dim, 2 * z_dim), lambda i: (0, 0)),    # W_head (mean|std)
            pl.BlockSpec((1, 2 * z_dim), lambda i: (0, 0)),        # b_head
        ],
        out_specs=pl.BlockSpec((tile, 2 * z_dim), lambda i: (i, 0)),
        compiler_params=pltpu.CompilerParams(
            dimension_semantics=("parallel",),
            vmem_limit_bytes=64 << 20,
        ),
    )(phi_flat, h_flat, a_flat,
      params["w_phi"], params["w_h"], params["w_a"], params["b1"],
      params["w_head"], params["b_head"])

    fused = fused[:N]
    mean = fused[:, :z_dim].reshape(B, P, z_dim)
    std = fused[:, z_dim:].reshape(B, P, z_dim)
    return mean, std


def init_params(key, z_dim, h_dim, phi_x_dim, action_encoding, dtype=jnp.float32):
    """Deterministic synthetic parameters.

    Weight layout is [in_features, out_features]; W1 is pre-split along its
    input axis (phi_x | h | action) and the two heads are fused (mean | std).
    """
    in_dim = h_dim + phi_x_dim + action_encoding
    k1, k2, k3, k4, k5, k6 = jax.random.split(key, 6)
    s1 = 1.0 / jnp.sqrt(in_dim)
    s2 = 1.0 / jnp.sqrt(h_dim)
    w1 = jax.random.normal(k1, (in_dim, h_dim), dtype) * s1
    w_mean = jax.random.normal(k3, (h_dim, z_dim), dtype) * s2
    w_std = jax.random.normal(k5, (h_dim, z_dim), dtype) * s2
    b_mean = jax.random.normal(k4, (1, z_dim), dtype) * s2
    b_std = jax.random.normal(k6, (1, z_dim), dtype) * s2
    return {
        # concat order in the PyTorch module: [phi_x, h, encoded_action]
        "w_phi": w1[:phi_x_dim],
        "w_h": w1[phi_x_dim:phi_x_dim + h_dim],
        "w_a": w1[phi_x_dim + h_dim:],
        "b1": jax.random.normal(k2, (1, h_dim), dtype) * s1,
        "w_head": jnp.concatenate([w_mean, w_std], axis=1),
        "b_head": jnp.concatenate([b_mean, b_std], axis=1),
    }


def reference(phi_x, h, encoded_action, params):
    """Pure-JAX reference matching the PyTorch forward semantics."""
    B, P, _ = phi_x.shape
    z_dim = params["b_head"].shape[-1] // 2
    phi_flat = phi_x.reshape(B * P, -1)
    h_flat = h.reshape(B * P, -1)
    a_flat = encoded_action.reshape(B * P, -1)
    t = jax.nn.relu(phi_flat @ params["w_phi"] + h_flat @ params["w_h"]
                    + a_flat @ params["w_a"] + params["b1"])
    y = t @ params["w_head"] + params["b_head"]
    mean = y[:, :z_dim].reshape(B, P, z_dim)
    std = jax.nn.softplus(y[:, z_dim:]).reshape(B, P, z_dim)
    return mean, std


if __name__ == "__main__":
    B, P = 2, 4
    z_dim, h_dim, phi_x_dim, action_encoding = 16, 32, 24, 8

    key = jax.random.PRNGKey(0)
    kp, kphi, kh, ka = jax.random.split(key, 4)

    params = init_params(kp, z_dim, h_dim, phi_x_dim, action_encoding)
    phi_x = jax.random.normal(kphi, (B, P, phi_x_dim), jnp.float32)
    h = jax.random.normal(kh, (B, P, h_dim), jnp.float32)
    encoded_action = jax.random.normal(ka, (B, P, action_encoding), jnp.float32)

    mean, std = vrnn_proposal(phi_x, h, encoded_action, params)
    mean = jax.block_until_ready(mean)
    std = jax.block_until_ready(std)

    ref_mean, ref_std = reference(phi_x, h, encoded_action, params)
    assert mean.shape == (B, P, z_dim) and std.shape == (B, P, z_dim)
    assert jnp.allclose(mean, ref_mean, atol=1e-5, rtol=1e-5)
    assert jnp.allclose(std, ref_std, atol=1e-5, rtol=1e-5)
    assert bool(jnp.all(std > 0.0))

    print("KERNEL_OK")
</pallas_src>

<mosaic_0001>
module attributes {stable_mosaic.version = 11 : i64} {
  func.func @vrnn_proposal_kernel(%arg0: i32, %arg1: memref<8x24xf32, #tpu.memory_space<vmem>>, %arg2: memref<8x32xf32, #tpu.memory_space<vmem>>, %arg3: memref<8x8xf32, #tpu.memory_space<vmem>>, %arg4: memref<24x32xf32, #tpu.memory_space<vmem>>, %arg5: memref<32x32xf32, #tpu.memory_space<vmem>>, %arg6: memref<8x32xf32, #tpu.memory_space<vmem>>, %arg7: memref<1x32xf32, #tpu.memory_space<vmem>>, %arg8: memref<32x32xf32, #tpu.memory_space<vmem>>, %arg9: memref<1x32xf32, #tpu.memory_space<vmem>>, %arg10: memref<8x32xf32, #tpu.memory_space<vmem>>) attributes {dimension_semantics = [#tpu.dimension_semantics<parallel>], iteration_bounds = array<i64: 1>, scalar_prefetch = 0 : i64, scratch_operands = 0 : i64, tpu.core_type = #tpu.core_type<tc>, window_params = [{transform_indices = @transform_0, window_bounds = array<i64: 8, 24>}, {transform_indices = @transform_1, window_bounds = array<i64: 8, 32>}, {transform_indices = @transform_2, window_bounds = array<i64: 8, 8>}, {pipeline_mode = #tpu.pipeline_mode<synchronous>, transform_indices = @transform_3, window_bounds = array<i64: 24, 32>}, {pipeline_mode = #tpu.pipeline_mode<synchronous>, transform_indices = @transform_4, window_bounds = array<i64: 32, 32>}, {pipeline_mode = #tpu.pipeline_mode<synchronous>, transform_indices = @transform_5, window_bounds = array<i64: 8, 32>}, {pipeline_mode = #tpu.pipeline_mode<synchronous>, transform_indices = @transform_6, window_bounds = array<i64: 1, 32>}, {pipeline_mode = #tpu.pipeline_mode<synchronous>, transform_indices = @transform_7, window_bounds = array<i64: 32, 32>}, {pipeline_mode = #tpu.pipeline_mode<synchronous>, transform_indices = @transform_8, window_bounds = array<i64: 1, 32>}, {transform_indices = @transform_9, window_bounds = array<i64: 8, 32>}]} {
    %c0 = arith.constant 0 : index
    %c0_0 = arith.constant 0 : index
    %0 = vector.load %arg1[%c0, %c0_0] : memref<8x24xf32, #tpu.memory_space<vmem>>, vector<8x24xf32>
    %c0_1 = arith.constant 0 : index
    %c0_2 = arith.constant 0 : index
    %1 = vector.load %arg4[%c0_1, %c0_2] : memref<24x32xf32, #tpu.memory_space<vmem>>, vector<24x32xf32>
    %cst = arith.constant dense<0.000000e+00> : vector<8x32xf32>
    %2 = tpu.matmul %0, %1, %cst {dimension_numbers = #tpu.dot_dimension_numbers<[1], [0], [0], [1], [0, 0, 1, 1], [], []>} : vector<8x24xf32>, vector<24x32xf32>, vector<8x32xf32> -> vector<8x32xf32>
    %c0_3 = arith.constant 0 : index
    %c0_4 = arith.constant 0 : index
    %3 = vector.load %arg2[%c0_3, %c0_4] : memref<8x32xf32, #tpu.memory_space<vmem>>, vector<8x32xf32>
    %c0_5 = arith.constant 0 : index
    %c0_6 = arith.constant 0 : index
    %4 = vector.load %arg5[%c0_5, %c0_6] : memref<32x32xf32, #tpu.memory_space<vmem>>, vector<32x32xf32>
    %cst_7 = arith.constant dense<0.000000e+00> : vector<8x32xf32>
    %5 = tpu.matmul %3, %4, %cst_7 {dimension_numbers = #tpu.dot_dimension_numbers<[1], [0], [0], [1], [0, 0, 1, 1], [], []>} : vector<8x32xf32>, vector<32x32xf32>, vector<8x32xf32> -> vector<8x32xf32>
    %6 = arith.addf %2, %5 : vector<8x32xf32>
    %c0_8 = arith.constant 0 : index
    %c0_9 = arith.constant 0 : index
    %7 = vector.load %arg3[%c0_8, %c0_9] : memref<8x8xf32, #tpu.memory_space<vmem>>, vector<8x8xf32>
    %c0_10 = arith.constant 0 : index
    %c0_11 = arith.constant 0 : index
    %8 = vector.load %arg6[%c0_10, %c0_11] : memref<8x32xf32, #tpu.memory_space<vmem>>, vector<8x32xf32>
    %cst_12 = arith.constant dense<0.000000e+00> : vector<8x32xf32>
    %9 = tpu.matmul %7, %8, %cst_12 {dimension_numbers = #tpu.dot_dimension_numbers<[1], [0], [0], [1], [0, 0, 1, 1], [], []>} : vector<8x8xf32>, vector<8x32xf32>, vector<8x32xf32> -> vector<8x32xf32>
    %10 = arith.addf %6, %9 : vector<8x32xf32>
    %c0_13 = arith.constant 0 : index
    %c0_14 = arith.constant 0 : index
    %11 = vector.load %arg7[%c0_13, %c0_14] : memref<1x32xf32, #tpu.memory_space<vmem>>, vector<1x32xf32>
    %12 = vector.broadcast %11 : vector<1x32xf32> to vector<8x32xf32>
    %13 = arith.addf %10, %12 : vector<8x32xf32>
    %cst_15 = arith.constant 0.000000e+00 : f32
    %14 = vector.broadcast %cst_15 : f32 to vector<8x32xf32>
    %15 = arith.maximumf %13, %14 : vector<8x32xf32>
    %c0_16 = arith.constant 0 : index
    %c0_17 = arith.constant 0 : index
    %16 = vector.load %arg8[%c0_16, %c0_17] : memref<32x32xf32, #tpu.memory_space<vmem>>, vector<32x32xf32>
    %cst_18 = arith.constant dense<0.000000e+00> : vector<8x32xf32>
    %17 = tpu.matmul %15, %16, %cst_18 {dimension_numbers = #tpu.dot_dimension_numbers<[1], [0], [0], [1], [0, 0, 1, 1], [], []>} : vector<8x32xf32>, vector<32x32xf32>, vector<8x32xf32> -> vector<8x32xf32>
    %c0_19 = arith.constant 0 : index
    %c0_20 = arith.constant 0 : index
    %18 = vector.load %arg9[%c0_19, %c0_20] : memref<1x32xf32, #tpu.memory_space<vmem>>, vector<1x32xf32>
    %19 = vector.broadcast %18 : vector<1x32xf32> to vector<8x32xf32>
    %20 = arith.addf %17, %19 : vector<8x32xf32>
    %cst_21 = arith.constant 0.000000e+00 : f32
    %21 = vector.broadcast %cst_21 : f32 to vector<8x32xf32>
    %22 = arith.maximumf %20, %21 : vector<8x32xf32>
    %23 = math.absf %20 : vector<8x32xf32>
    %cst_22 = arith.constant 0.000000e+00 : f32
    %24 = vector.broadcast %cst_22 : f32 to vector<8x32xf32>
    %25 = arith.subf %24, %23 : vector<8x32xf32>
    %26 = math.exp %25 : vector<8x32xf32>
    %27 = math.log1p %26 : vector<8x32xf32>
    %28 = arith.addf %22, %27 : vector<8x32xf32>
    %29 = tpu.iota {dimensions = array<i32: 1>} : vector<8x32xi32>
    %c16_i32 = arith.constant 16 : i32
    %30 = vector.broadcast %c16_i32 : i32 to vector<8x32xi32>
    %31 = arith.cmpi slt, %29, %30 : vector<8x32xi32>
    %32 = arith.select %31, %20, %28 : vector<8x32xi1>, vector<8x32xf32>
    %c0_23 = arith.constant 0 : index
    %c0_24 = arith.constant 0 : index
    %33 = vector.load %arg10[%c0_23, %c0_24] : memref<8x32xf32, #tpu.memory_space<vmem>>, vector<8x32xf32>
    tpu.vector_store %arg10[%c0_23, %c0_24], %32 {strides = array<i32>} : memref<8x32xf32, #tpu.memory_space<vmem>>, vector<8x32xf32>,
    return
  }
  func.func @transform_0(%arg0: i32) -> (i32, i32) {
    %c0_i32 = arith.constant 0 : i32
    %c0_i32_0 = arith.constant 0 : i32
    return %arg0, %c0_i32 : i32, i32
  }
  func.func @transform_1(%arg0: i32) -> (i32, i32) {
    %c0_i32 = arith.constant 0 : i32
    %c0_i32_0 = arith.constant 0 : i32
    return %arg0, %c0_i32 : i32, i32
  }
  func.func @transform_2(%arg0: i32) -> (i32, i32) {
    %c0_i32 = arith.constant 0 : i32
    %c0_i32_0 = arith.constant 0 : i32
    return %arg0, %c0_i32 : i32, i32
  }
  func.func @transform_3(%arg0: i32) -> (i32, i32) {
    %c0_i32 = arith.constant 0 : i32
    %c0_i32_0 = arith.constant 0 : i32
    %c0_i32_1 = arith.constant 0 : i32
    return %c0_i32, %c0_i32_0 : i32, i32
  }
  func.func @transform_4(%arg0: i32) -> (i32, i32) {
    %c0_i32 = arith.constant 0 : i32
    %c0_i32_0 = arith.constant 0 : i32
    %c0_i32_1 = arith.constant 0 : i32
    return %c0_i32, %c0_i32_0 : i32, i32
  }
  func.func @transform_5(%arg0: i32) -> (i32, i32) {
    %c0_i32 = arith.constant 0 : i32
    %c0_i32_0 = arith.constant 0 : i32
    %c0_i32_1 = arith.constant 0 : i32
    return %c0_i32, %c0_i32_0 : i32, i32
  }
  func.func @transform_6(%arg0: i32) -> (i32, i32) {
    %c0_i32 = arith.constant 0 : i32
    %c0_i32_0 = arith.constant 0 : i32
    %c0_i32_1 = arith.constant 0 : i32
    return %c0_i32, %c0_i32_0 : i32, i32
  }
  func.func @transform_7(%arg0: i32) -> (i32, i32) {
    %c0_i32 = arith.constant 0 : i32
    %c0_i32_0 = arith.constant 0 : i32
    %c0_i32_1 = arith.constant 0 : i32
    return %c0_i32, %c0_i32_0 : i32, i32
  }
  func.func @transform_8(%arg0: i32) -> (i32, i32) {
    %c0_i32 = arith.constant 0 : i32
    %c0_i32_0 = arith.constant 0 : i32
    %c0_i32_1 = arith.constant 0 : i32
    return %c0_i32, %c0_i32_0 : i32, i32
  }
  func.func @transform_9(%arg0: i32) -> (i32, i32) {
    %c0_i32 = arith.constant 0 : i32
    %c0_i32_0 = arith.constant 0 : i32
    return %arg0, %c0_i32 : i32, i32
  }
}

</mosaic_0001>

<llo_original>
// kernel: tpu_custom_call.1
$region0: #{tpu_custom_call.1}
  #allocation0 [shape = 'u32[]', space=smem, size = 0x4, offset = 0x4, fixed_abs, tag = 'smem constant byte address 0x4 - core index']
  #allocation1 [shape = 'u32[144,128]{1,0:T(1,128)}', space=vmem, size = 0x12000, scoped, tag = 'internal scratch']
  %s0 = inlined_call_operand.hbm [shape: f32[8,24], index: 0, kind: input, shape index: {}]
  %s1 = inlined_call_operand.hbm [shape: f32[8,32], index: 1, kind: input, shape index: {}]
  %s2 = inlined_call_operand.hbm [shape: f32[8,8], index: 2, kind: input, shape index: {}]
  %s3 = inlined_call_operand.hbm [shape: f32[24,32], index: 3, kind: input, shape index: {}]
  %s4 = inlined_call_operand.hbm [shape: f32[32,32], index: 4, kind: input, shape index: {}]
  %s5 = inlined_call_operand.vmem [shape: f32[8,32], index: 5, kind: input, shape index: {}]
  %s6 = inlined_call_operand.vmem [shape: f32[1,32], index: 6, kind: input, shape index: {}]
  %s7 = inlined_call_operand.hbm [shape: f32[32,32], index: 7, kind: input, shape index: {}]
  %s8 = inlined_call_operand.vmem [shape: f32[1,32], index: 8, kind: input, shape index: {}]
  %s9 = inlined_call_operand.hbm [shape: f32[8,32], index: 9, kind: output, shape index: {}]
  %s10 = sld [smem:[#allocation0]]
  $region70: #{tpu_custom_call.1} parent=0
    _
  %s12 = ssub.s32 1, %s10
  %s13 = scalar_select 0, %s12, %s10
  $region1: #{tpu_custom_call.1} parent=0
    #allocation2 [shape = 'u8[4096]{0}', space=vmem, size = 0x1000, scoped, tag = 'input window, operand 0, single buffered']
    #allocation3 [shape = 's32[1]{0}', space=sflag, size = 0x4, scoped, tag = 'scoped memory for tpu_custom_call.1']
    #allocation4 [shape = 's32[1]{0}', space=sflag, size = 0x4, scoped, tag = 'scoped memory for tpu_custom_call.1']
    #allocation5 [shape = 'u8[4096]{0}', space=vmem, size = 0x1000, scoped, tag = 'input window, operand 1, single buffered']
    #allocation6 [shape = 's32[1]{0}', space=sflag, size = 0x4, scoped, tag = 'scoped memory for tpu_custom_call.1']
    #allocation7 [shape = 'u8[4096]{0}', space=vmem, size = 0x1000, scoped, tag = 'input window, operand 2, single buffered']
    #allocation8 [shape = 'u8[12288]{0}', space=vmem, size = 0x3000, scoped, tag = 'input window, operand 3, single buffered']
    #allocation9 [shape = 's32[1]{0}', space=sflag, size = 0x4, scoped, tag = 'scoped memory for tpu_custom_call.1']
    #allocation10 [shape = 'u8[16384]{0}', space=vmem, size = 0x4000, scoped, tag = 'input window, operand 4, single buffered']
    #allocation11 [shape = 'u8[16384]{0}', space=vmem, size = 0x4000, scoped, tag = 'input window, operand 7, single buffered']
    #allocation12 [shape = 's32[1]{0}', space=sflag, size = 0x4, scoped, tag = 'scoped memory for tpu_custom_call.1']
    #allocation13 [shape = 'u8[4096]{0}', space=vmem, size = 0x1000, scoped, tag = 'output window, operand 0, single buffered']
    %14 = vsyncpa [#allocation3], 0
    %15 = vsyncpa [#allocation6], 0
    %16 = vsyncpa [#allocation9], 0
    %17 = vsyncpa [#allocation12], 0
    %18 = vsyncpa [#allocation4], 0
    // Predicated region
    $region2: #{tpu_custom_call.1} parent=1 // pred_check
      _
    $region3: #{tpu_custom_call.1} parent=1 // pred_check_branch
      %20 = sbr.rel (0) target = $region5
    $region4: #{tpu_custom_call.1} parent=1 // pred_region
      %s22 = ssub.s32 128, 128
      %23 = vsyncadd [#allocation3], %s22
      %s25 = sshll.u32 [#allocation2], 4
      %s26 = int_to_ptr.vmem [resolvable:$true] %s25
      %28 = dma.hbm_to_vmem [thread:$0]  %s0, 128, %s26, [#allocation3]
    $region5: #{tpu_custom_call.1} parent=1 // pred_fallthru
      _
    // Predicated region
    $region6: #{tpu_custom_call.1} parent=1 // pred_check
      _
    $region7: #{tpu_custom_call.1} parent=1 // pred_check_branch
      %30 = sbr.rel (0) target = $region9
    $region8: #{tpu_custom_call.1} parent=1 // pred_region
      %s32 = ssub.s32 128, 128
      %33 = vsyncadd [#allocation6], %s32
      %s35 = sshll.u32 [#allocation5], 4
      %s36 = int_to_ptr.vmem [resolvable:$true] %s35
      %38 = dma.hbm_to_vmem [thread:$0]  %s1, 128, %s36, [#allocation6]
    $region9: #{tpu_custom_call.1} parent=1 // pred_fallthru
      _
    // Predicated region
    $region10: #{tpu_custom_call.1} parent=1 // pred_check
      _
    $region11: #{tpu_custom_call.1} parent=1 // pred_check_branch
      %40 = sbr.rel (0) target = $region13
    $region12: #{tpu_custom_call.1} parent=1 // pred_region
      %s42 = ssub.s32 128, 128
      %43 = vsyncadd [#allocation6], %s42
      %s45 = sshll.u32 [#allocation7], 4
      %s46 = int_to_ptr.vmem [resolvable:$true] %s45
      %48 = dma.hbm_to_vmem [thread:$0]  %s2, 128, %s46, [#allocation6]
    $region13: #{tpu_custom_call.1} parent=1 // pred_fallthru
      _
    // Predicated region
    $region14: #{tpu_custom_call.1} parent=1 // pred_check
      _
    $region15: #{tpu_custom_call.1} parent=1 // pred_check_branch
      %50 = sbr.rel (0) target = $region17
    $region16: #{tpu_custom_call.1} parent=1 // pred_region
      %s52 = ssub.s32 384, 384
      %53 = vsyncadd [#allocation9], %s52
      %s54 = sshll.u32 [#allocation8], 4
      %s55 = int_to_ptr.vmem [resolvable:$true] %s54
      %60 = dma.hbm_to_vmem [thread:$0]  %s3, 384, %s55, [#allocation9], 128, 128, 8
    $region17: #{tpu_custom_call.1} parent=1 // pred_fallthru
      _
    // Predicated region
    $region18: #{tpu_custom_call.1} parent=1 // pred_check
      _
    $region19: #{tpu_custom_call.1} parent=1 // pred_check_branch
      %62 = sbr.rel (0) target = $region21
    $region20: #{tpu_custom_call.1} parent=1 // pred_region
      %s64 = ssub.s32 512, 512
      %65 = vsyncadd [#allocation9], %s64
      %s66 = sshll.u32 [#allocation10], 4
      %s67 = int_to_ptr.vmem [resolvable:$true] %s66
      %72 = dma.hbm_to_vmem [thread:$0]  %s4, 512, %s67, [#allocation9], 128, 128, 8
    $region21: #{tpu_custom_call.1} parent=1 // pred_fallthru
      _
    // Predicated region
    $region22: #{tpu_custom_call.1} parent=1 // pred_check
      _
    $region23: #{tpu_custom_call.1} parent=1 // pred_check_branch
      %74 = sbr.rel (0) target = $region25
    $region24: #{tpu_custom_call.1} parent=1 // pred_region
      _
    $region25: #{tpu_custom_call.1} parent=1 // pred_fallthru
      _
    // Predicated region
    $region26: #{tpu_custom_call.1} parent=1 // pred_check
      _
    $region27: #{tpu_custom_call.1} parent=1 // pred_check_branch
      %76 = sbr.rel (0) target = $region29
    $region28: #{tpu_custom_call.1} parent=1 // pred_region
      _
    $region29: #{tpu_custom_call.1} parent=1 // pred_fallthru
      _
    // Predicated region
    $region30: #{tpu_custom_call.1} parent=1 // pred_check
      _
    $region31: #{tpu_custom_call.1} parent=1 // pred_check_branch
      %78 = sbr.rel (0) target = $region33
    $region32: #{tpu_custom_call.1} parent=1 // pred_region
      %s80 = ssub.s32 512, 512
      %81 = vsyncadd [#allocation12], %s80
      %s82 = sshll.u32 [#allocation11], 4
      %s83 = int_to_ptr.vmem [resolvable:$true] %s82
      %88 = dma.hbm_to_vmem [thread:$0]  %s7, 512, %s83, [#allocation12], 128, 128, 8
    $region33: #{tpu_custom_call.1} parent=1 // pred_fallthru
      _
    // Predicated region
    $region34: #{tpu_custom_call.1} parent=1 // pred_check
      _
    $region35: #{tpu_custom_call.1} parent=1 // pred_check_branch
      %90 = sbr.rel (0) target = $region37
    $region36: #{tpu_custom_call.1} parent=1 // pred_region
      _
    $region37: #{tpu_custom_call.1} parent=1 // pred_fallthru
      _
    // Predicated region
    $region38: #{tpu_custom_call.1} parent=1 // pred_check
      _
    $region39: #{tpu_custom_call.1} parent=1 // pred_check_branch
      %92 = sbr.rel (0) target = $region41
    $region40: #{tpu_custom_call.1} parent=1 // pred_region
      %93 = dma.done [#allocation3], 128
    $region41: #{tpu_custom_call.1} parent=1 // pred_fallthru
      _
    // Predicated region
    $region42: #{tpu_custom_call.1} parent=1 // pred_check
      _
    $region43: #{tpu_custom_call.1} parent=1 // pred_check_branch
      %95 = sbr.rel (0) target = $region45
    $region44: #{tpu_custom_call.1} parent=1 // pred_region
      %96 = dma.done [#allocation6], 128
    $region45: #{tpu_custom_call.1} parent=1 // pred_fallthru
      _
    // Predicated region
    $region46: #{tpu_custom_call.1} parent=1 // pred_check
      _
    $region47: #{tpu_custom_call.1} parent=1 // pred_check_branch
      %98 = sbr.rel (0) target = $region49
    $region48: #{tpu_custom_call.1} parent=1 // pred_region
      %99 = dma.done [#allocation6], 128
    $region49: #{tpu_custom_call.1} parent=1 // pred_fallthru
      _
    // Predicated region
    $region50: #{tpu_custom_call.1} parent=1 // pred_check
      _
    $region51: #{tpu_custom_call.1} parent=1 // pred_check_branch
      %101 = sbr.rel (0) target = $region53
    $region52: #{tpu_custom_call.1} parent=1 // pred_region
      %102 = dma.done [#allocation9], 384
    $region53: #{tpu_custom_call.1} parent=1 // pred_fallthru
      _
    // Predicated region
    $region54: #{tpu_custom_call.1} parent=1 // pred_check
      _
    $region55: #{tpu_custom_call.1} parent=1 // pred_check_branch
      %104 = sbr.rel (0) target = $region57
    $region56: #{tpu_custom_call.1} parent=1 // pred_region
      %105 = dma.done [#allocation9], 512
    $region57: #{tpu_custom_call.1} parent=1 // pred_fallthru
      _
    // Predicated region
    $region58: #{tpu_custom_call.1} parent=1 // pred_check
      _
    $region59: #{tpu_custom_call.1} parent=1 // pred_check_branch
      %107 = sbr.rel (0) target = $region61
    $region60: #{tpu_custom_call.1} parent=1 // pred_region
      %108 = dma.done [#allocation12], 512
    $region61: #{tpu_custom_call.1} parent=1 // pred_fallthru
      _
    %v109 = vld [vmem:[#allocation2] sm:$0xff]
    %v110 = vld [vmem:[#allocation8] sm:$0xff]
    %v111 = vld [vmem:[#allocation8 + $0x8] sm:$0xff]
    %v112 = vld [vmem:[#allocation8 + $0x10] sm:$0xff]
    %v113 = vld [vmem:[#allocation5] sm:$0xff]
    %v114 = vld [vmem:[#allocation10] sm:$0xff]
    %v115 = vld [vmem:[#allocation10 + $0x8] sm:$0xff]
    %v116 = vld [vmem:[#allocation10 + $0x10] sm:$0xff]
    %v117 = vld [vmem:[#allocation10 + $0x18] sm:$0xff]
    %vm118 = vcmask 261120
    %v120 = vsel %vm118, %v113, 0
    %122 = vmatprep.subr.mxu0 0.0
    %123 = vmatpush1.msra.mxu0 0.0
    %124 = vmatprep.subr.mxu0 0.0
    %125 = vmatpush1.msra.mxu0 0.0
    %126 = vmatprep.subr.mxu0 0.0
    %127 = vmatpush1.msra.mxu0 0.0
    %128 = vmatprep.subr.mxu0 0.0
    %129 = vmatpush1.msra.mxu0 0.0
    %130 = vmatprep.subr.mxu0 0.0
    %131 = vmatpush1.msra.mxu0 0.0
    %132 = vmatprep.subr.mxu0 0.0
    %133 = vmatpush1.msra.mxu0 0.0
    %134 = vmatprep.subr.mxu0 0.0
    %135 = vmatpush1.msra.mxu0 0.0
    %136 = vmatprep.subr.mxu0 0.0
    %137 = vmatpush1.msra.mxu0 0.0
    %138 = vmatprep.subr.mxu0 0.0
    %139 = vmatpush1.msra.mxu0 0.0
    %140 = vmatprep.subr.mxu0 0.0
    %141 = vmatpush1.msra.mxu0 0.0
    %142 = vmatprep.subr.mxu0 0.0
    %143 = vmatpush1.msra.mxu0 0.0
    %144 = vmatprep.subr.mxu0 0.0
    %145 = vmatpush1.msra.mxu0 0.0
    %146 = vmatprep.subr.mxu0 0.0
    %147 = vmatpush1.msra.mxu0 %v117
    %148 = vmatprep.subr.mxu0 0.0
    %149 = vmatpush1.msra.mxu0 %v116
    %150 = vmatprep.subr.mxu0 0.0
    %151 = vmatpush1.msra.mxu0 %v115
    %152 = vmatprep.subr.mxu0 0.0
    %153 = vmatpush1.msra.mxu0 %v114
    %154 = vmatprep.subr.mxu0 0.0
    %155 = vmatpush2.msra.mxu0 0.0
    %156 = vmatprep.subr.mxu0 0.0
    %157 = vmatpush2.msra.mxu0 0.0
    %158 = vmatprep.subr.mxu0 0.0
    %159 = vmatpush2.msra.mxu0 0.0
    %160 = vmatprep.subr.mxu0 0.0
    %161 = vmatpush2.msra.mxu0 0.0
    %162 = vmatprep.subr.mxu0 0.0
    %163 = vmatpush2.msra.mxu0 0.0
    %164 = vmatprep.subr.mxu0 0.0
    %165 = vmatpush2.msra.mxu0 0.0
    %166 = vmatprep.subr.mxu0 0.0
    %167 = vmatpush2.msra.mxu0 0.0
    %168 = vmatprep.subr.mxu0 0.0
    %169 = vmatpush2.msra.mxu0 0.0
    %170 = vmatprep.subr.mxu0 0.0
    %171 = vmatpush2.msra.mxu0 0.0
    %172 = vmatprep.subr.mxu0 0.0
    %173 = vmatpush2.msra.mxu0 0.0
    %174 = vmatprep.subr.mxu0 0.0
    %175 = vmatpush2.msra.mxu0 0.0
    %176 = vmatprep.subr.mxu0 0.0
    %177 = vmatpush2.msra.mxu0 0.0
    %178 = vmatprep.subr.mxu0 0.0
    %179 = vmatpush2.msra.mxu0 0.0
    %180 = vmatprep.subr.mxu0 0.0
    %181 = vmatpush2.msra.mxu0 0.0
    %182 = vmatprep.subr.mxu0 0.0
    %183 = vmatpush2.msra.mxu0 0.0
    %184 = vmatprep.subr.mxu0 0.0
    %185 = vmatpush2.msra.mxu0 0.0
    %186 = vmatprep.mubr.f32.mxu0 0.0
    %187 = vmatmul.mubr.f32.gmra.mxu0 %v120
    %v188 = vpop.f32.mrf.mxu0
    %v189 = vadd.f32 0.0, %v188
    %v190 = vpop.f32.mrf.mxu0
    %191 = vdwg.mxu0
    %vm192 = vcmask 195584
    %v194 = vsel %vm192, %v109, 0
    %196 = vmatprep.subr.mxu0 0.0
    %197 = vmatpush1.msra.mxu0 0.0
    %198 = vmatprep.subr.mxu0 0.0
    %199 = vmatpush1.msra.mxu0 0.0
    %200 = vmatprep.subr.mxu0 0.0
    %201 = vmatpush1.msra.mxu0 0.0
    %202 = vmatprep.subr.mxu0 0.0
    %203 = vmatpush1.msra.mxu0 0.0
    %204 = vmatprep.subr.mxu0 0.0
    %205 = vmatpush1.msra.mxu0 0.0
    %206 = vmatprep.subr.mxu0 0.0
    %207 = vmatpush1.msra.mxu0 0.0
    %208 = vmatprep.subr.mxu0 0.0
    %209 = vmatpush1.msra.mxu0 0.0
    %210 = vmatprep.subr.mxu0 0.0
    %211 = vmatpush1.msra.mxu0 0.0
    %212 = vmatprep.subr.mxu0 0.0
    %213 = vmatpush1.msra.mxu0 0.0
    %214 = vmatprep.subr.mxu0 0.0
    %215 = vmatpush1.msra.mxu0 0.0
    %216 = vmatprep.subr.mxu0 0.0
    %217 = vmatpush1.msra.mxu0 0.0
    %218 = vmatprep.subr.mxu0 0.0
    %219 = vmatpush1.msra.mxu0 0.0
    %220 = vmatprep.subr.mxu0 0.0
    %221 = vmatpush1.msra.mxu0 0.0
    %222 = vmatprep.subr.mxu0 0.0
    %223 = vmatpush1.msra.mxu0 %v112
    %224 = vmatprep.subr.mxu0 0.0
    %225 = vmatpush1.msra.mxu0 %v111
    %226 = vmatprep.subr.mxu0 0.0
    %227 = vmatpush1.msra.mxu0 %v110
    %228 = vmatprep.subr.mxu0 0.0
    %229 = vmatpush2.msra.mxu0 0.0
    %230 = vmatprep.subr.mxu0 0.0
    %231 = vmatpush2.msra.mxu0 0.0
    %232 = vmatprep.subr.mxu0 0.0
    %233 = vmatpush2.msra.mxu0 0.0
    %234 = vmatprep.subr.mxu0 0.0
    %235 = vmatpush2.msra.mxu0 0.0
    %236 = vmatprep.subr.mxu0 0.0
    %237 = vmatpush2.msra.mxu0 0.0
    %238 = vmatprep.subr.mxu0 0.0
    %239 = vmatpush2.msra.mxu0 0.0
    %240 = vmatprep.subr.mxu0 0.0
    %241 = vmatpush2.msra.mxu0 0.0
    %242 = vmatprep.subr.mxu0 0.0
    %243 = vmatpush2.msra.mxu0 0.0
    %244 = vmatprep.subr.mxu0 0.0
    %245 = vmatpush2.msra.mxu0 0.0
    %246 = vmatprep.subr.mxu0 0.0
    %247 = vmatpush2.msra.mxu0 0.0
    %248 = vmatprep.subr.mxu0 0.0
    %249 = vmatpush2.msra.mxu0 0.0
    %250 = vmatprep.subr.mxu0 0.0
    %251 = vmatpush2.msra.mxu0 0.0
    %252 = vmatprep.subr.mxu0 0.0
    %253 = vmatpush2.msra.mxu0 0.0
    %254 = vmatprep.subr.mxu0 0.0
    %255 = vmatpush2.msra.mxu0 0.0
    %256 = vmatprep.subr.mxu0 0.0
    %257 = vmatpush2.msra.mxu0 0.0
    %258 = vmatprep.subr.mxu0 0.0
    %259 = vmatpush2.msra.mxu0 0.0
    %260 = vmatprep.mubr.f32.mxu0 0.0
    %261 = vmatmul.mubr.f32.gmra.mxu0 %v194
    %v262 = vpop.f32.mrf.mxu0
    %v263 = vadd.f32 %v189, %v262
    %v264 = vpop.f32.mrf.mxu0
    %265 = vdwg.mxu0
    %v266 = vld [vmem:[#allocation7] sm:$0xff]
    %v267 = vld [vmem:[%s5] sm:$0xff]
    %vm268 = vcmask 64512
    %v270 = vsel %vm268, %v266, 0
    %272 = vmatprep.subr.mxu0 0.0
    %273 = vmatpush1.msra.mxu0 0.0
    %274 = vmatprep.subr.mxu0 0.0
    %275 = vmatpush1.msra.mxu0 0.0
    %276 = vmatprep.subr.mxu0 0.0
    %277 = vmatpush1.msra.mxu0 0.0
    %278 = vmatprep.subr.mxu0 0.0
    %279 = vmatpush1.msra.mxu0 0.0
    %280 = vmatprep.subr.mxu0 0.0
    %281 = vmatpush1.msra.mxu0 0.0
    %282 = vmatprep.subr.mxu0 0.0
    %283 = vmatpush1.msra.mxu0 0.0
    %284 = vmatprep.subr.mxu0 0.0
    %285 = vmatpush1.msra.mxu0 0.0
    %286 = vmatprep.subr.mxu0 0.0
    %287 = vmatpush1.msra.mxu0 0.0
    %288 = vmatprep.subr.mxu0 0.0
    %289 = vmatpush1.msra.mxu0 0.0
    %290 = vmatprep.subr.mxu0 0.0
    %291 = vmatpush1.msra.mxu0 0.0
    %292 = vmatprep.subr.mxu0 0.0
    %293 = vmatpush1.msra.mxu0 0.0
    %294 = vmatprep.subr.mxu0 0.0
    %295 = vmatpush1.msra.mxu0 0.0
    %296 = vmatprep.subr.mxu0 0.0
    %297 = vmatpush1.msra.mxu0 0.0
    %298 = vmatprep.subr.mxu0 0.0
    %299 = vmatpush1.msra.mxu0 0.0
    %300 = vmatprep.subr.mxu0 0.0
    %301 = vmatpush1.msra.mxu0 0.0
    %302 = vmatprep.subr.mxu0 0.0
    %303 = vmatpush1.msra.mxu0 %v267
    %304 = vmatprep.subr.mxu0 0.0
    %305 = vmatpush2.msra.mxu0 0.0
    %306 = vmatprep.subr.mxu0 0.0
    %307 = vmatpush2.msra.mxu0 0.0
    %308 = vmatprep.subr.mxu0 0.0
    %309 = vmatpush2.msra.mxu0 0.0
    %310 = vmatprep.subr.mxu0 0.0
    %311 = vmatpush2.msra.mxu0 0.0
    %312 = vmatprep.subr.mxu0 0.0
    %313 = vmatpush2.msra.mxu0 0.0
    %314 = vmatprep.subr.mxu0 0.0
    %315 = vmatpush2.msra.mxu0 0.0
    %316 = vmatprep.subr.mxu0 0.0
    %317 = vmatpush2.msra.mxu0 0.0
    %318 = vmatprep.subr.mxu0 0.0
    %319 = vmatpush2.msra.mxu0 0.0
    %320 = vmatprep.subr.mxu0 0.0
    %321 = vmatpush2.msra.mxu0 0.0
    %322 = vmatprep.subr.mxu0 0.0
    %323 = vmatpush2.msra.mxu0 0.0
    %324 = vmatprep.subr.mxu0 0.0
    %325 = vmatpush2.msra.mxu0 0.0
    %326 = vmatprep.subr.mxu0 0.0
    %327 = vmatpush2.msra.mxu0 0.0
    %328 = vmatprep.subr.mxu0 0.0
    %329 = vmatpush2.msra.mxu0 0.0
    %330 = vmatprep.subr.mxu0 0.0
    %331 = vmatpush2.msra.mxu0 0.0
    %332 = vmatprep.subr.mxu0 0.0
    %333 = vmatpush2.msra.mxu0 0.0
    %334 = vmatprep.subr.mxu0 0.0
    %335 = vmatpush2.msra.mxu0 0.0
    %336 = vmatprep.mubr.f32.mxu0 0.0
    %337 = vmatmul.mubr.f32.gmra.mxu0 %v270
    %v338 = vpop.f32.mrf.mxu0
    %v339 = vadd.f32 0.0, %v338
    %v340 = vpop.f32.mrf.mxu0
    %341 = vdwg.mxu0
    %v342 = vadd.f32 %v263, %v339
    %v343 = vld [vmem:[%s6] sm:$0x1]
    %v345 = vlaneseq
    %v346 = vshrl.u32 %v345, 7
    %v347 = vsub.s32 0, %v346
    %v348 = vrot.slane %v343, %v347
    %v350 = vadd.f32 %v342, %v348
    %v351 = vmax.f32 %v350, 0.0
    %v352 = vld [vmem:[#allocation11] sm:$0xff]
    %v353 = vld [vmem:[#allocation11 + $0x8] sm:$0xff]
    %v354 = vld [vmem:[#allocation11 + $0x10] sm:$0xff]
    %v355 = vld [vmem:[#allocation11 + $0x18] sm:$0xff]
    %v356 = vld [vmem:[%s8] sm:$0x1]
    %v358 = vlaneseq
    %v359 = vshrl.u32 %v358, 7
    %v360 = vsub.s32 0, %v359
    %v361 = vrot.slane %v356, %v360
    %v364 = vsel %vm118, %v351, 0
    %366 = vmatprep.subr.mxu0 0.0
    %367 = vmatpush1.msra.mxu0 0.0
    %368 = vmatprep.subr.mxu0 0.0
    %369 = vmatpush1.msra.mxu0 0.0
    %370 = vmatprep.subr.mxu0 0.0
    %371 = vmatpush1.msra.mxu0 0.0
    %372 = vmatprep.subr.mxu0 0.0
    %373 = vmatpush1.msra.mxu0 0.0
    %374 = vmatprep.subr.mxu0 0.0
    %375 = vmatpush1.msra.mxu0 0.0
    %376 = vmatprep.subr.mxu0 0.0
    %377 = vmatpush1.msra.mxu0 0.0
    %378 = vmatprep.subr.mxu0 0.0
    %379 = vmatpush1.msra.mxu0 0.0
    %380 = vmatprep.subr.mxu0 0.0
    %381 = vmatpush1.msra.mxu0 0.0
    %382 = vmatprep.subr.mxu0 0.0
    %383 = vmatpush1.msra.mxu0 0.0
    %384 = vmatprep.subr.mxu0 0.0
    %385 = vmatpush1.msra.mxu0 0.0
    %386 = vmatprep.subr.mxu0 0.0
    %387 = vmatpush1.msra.mxu0 0.0
    %388 = vmatprep.subr.mxu0 0.0
    %389 = vmatpush1.msra.mxu0 0.0
    %390 = vmatprep.subr.mxu0 0.0
    %391 = vmatpush1.msra.mxu0 %v355
    %392 = vmatprep.subr.mxu0 0.0
    %393 = vmatpush1.msra.mxu0 %v354
    %394 = vmatprep.subr.mxu0 0.0
    %395 = vmatpush1.msra.mxu0 %v353
    %396 = vmatprep.subr.mxu0 0.0
    %397 = vmatpush1.msra.mxu0 %v352
    %398 = vmatprep.subr.mxu0 0.0
    %399 = vmatpush2.msra.mxu0 0.0
    %400 = vmatprep.subr.mxu0 0.0
    %401 = vmatpush2.msra.mxu0 0.0
    %402 = vmatprep.subr.mxu0 0.0
    %403 = vmatpush2.msra.mxu0 0.0
    %404 = vmatprep.subr.mxu0 0.0
    %405 = vmatpush2.msra.mxu0 0.0
    %406 = vmatprep.subr.mxu0 0.0
    %407 = vmatpush2.msra.mxu0 0.0
    %408 = vmatprep.subr.mxu0 0.0
    %409 = vmatpush2.msra.mxu0 0.0
    %410 = vmatprep.subr.mxu0 0.0
    %411 = vmatpush2.msra.mxu0 0.0
    %412 = vmatprep.subr.mxu0 0.0
    %413 = vmatpush2.msra.mxu0 0.0
    %414 = vmatprep.subr.mxu0 0.0
    %415 = vmatpush2.msra.mxu0 0.0
    %416 = vmatprep.subr.mxu0 0.0
    %417 = vmatpush2.msra.mxu0 0.0
    %418 = vmatprep.subr.mxu0 0.0
    %419 = vmatpush2.msra.mxu0 0.0
    %420 = vmatprep.subr.mxu0 0.0
    %421 = vmatpush2.msra.mxu0 0.0
    %422 = vmatprep.subr.mxu0 0.0
    %423 = vmatpush2.msra.mxu0 0.0
    %424 = vmatprep.subr.mxu0 0.0
    %425 = vmatpush2.msra.mxu0 0.0
    %426 = vmatprep.subr.mxu0 0.0
    %427 = vmatpush2.msra.mxu0 0.0
    %428 = vmatprep.subr.mxu0 0.0
    %429 = vmatpush2.msra.mxu0 0.0
    %430 = vmatprep.mubr.f32.mxu0 0.0
    %431 = vmatmul.mubr.f32.gmra.mxu0 %v364
    %v432 = vpop.f32.mrf.mxu0
    %v433 = vadd.f32 %v361, %v432
    %v434 = vpop.f32.mrf.mxu0
    %435 = vdwg.mxu0
    %v436 = vmax.f32 %v433, 0.0
    %v437 = vand.u32 2147483647, %v433
    %v438 = vsub.f32 0.0, %v437
    %v439 = vmul.f32 %v438, 1.442695
    %v440 = vpow.pop %v439
    %v441 = vadd.f32 %v440, 1.0
    %v442 = vlog2.pop %v441
    %v443 = vmul.f32 %v442, 0.6931472
    %v444 = vmul.f32 -0.5, %v440
    %v445 = vadd.f32 %v444, 1.0
    %v446 = vmul.f32 %v445, %v440
    %v447 = vand.u32 2147483647, %v440
    %vm448 = vcmp.lt.f32.partialorder %v447, 0.0004427343
    %v449 = vsel %vm448, %v446, %v443
    %v450 = vadd.f32 %v436, %v449
    %v451 = vlaneseq
    %v452 = vand.u32 %v451, 127
    %vm453 = vcmp.lt.s32.totalorder %v452, 16
    %v454 = vsel %vm453, %v433, %v450
    %455 = vst.msk [vmem:[#allocation13] sm:$0xff] %vm118, %v454
    // Predicated region
    $region62: #{tpu_custom_call.1} parent=1 // pred_check
      _
    $region63: #{tpu_custom_call.1} parent=1 // pred_check_branch
      %457 = sbr.rel (0) target = $region65
    $region64: #{tpu_custom_call.1} parent=1 // pred_region
      %s459 = ssub.s32 128, 128
      %460 = vsyncadd [#allocation4], %s459
      %s462 = sshll.u32 [#allocation13], 4
      %s463 = int_to_ptr.vmem [resolvable:$true] %s462
      %465 = dma.vmem_to_hbm [thread:$0]  %s463, 128, %s9, [#allocation4]
    $region65: #{tpu_custom_call.1} parent=1 // pred_fallthru
      _
    // Predicated region
    $region66: #{tpu_custom_call.1} parent=1 // pred_check
      _
    $region67: #{tpu_custom_call.1} parent=1 // pred_check_branch
      %467 = sbr.rel (0) target = $region69
    $region68: #{tpu_custom_call.1} parent=1 // pred_region
      %468 = dma.done [#allocation4], 128
    $region69: #{tpu_custom_call.1} parent=1 // pred_fallthru
      _
    %469 = vsyncpa [#allocation3], 1
    %470 = vsyncpa [#allocation6], 1
    %471 = vsyncpa [#allocation9], 1
    %472 = vsyncpa [#allocation12], 1
    %473 = vsyncpa [#allocation4], 1

</llo_original>
